<compile_context>
chip_gen: v6e
topology: v6e:2x2x1
jax: 0.10.0
libtpu: 0.0.40
codegen_flags: <defaults>
</compile_context>

<pallas_src>
import jax
import jax.numpy as jnp
from jax.experimental import pallas as pl
from jax.experimental.pallas import tpu as pltpu


def _gaussian_smearing_kernel(coeff_ref, dist_ref, offset_ref, out_ref):
    # coeff_ref:  (1, 1)         SMEM  scalar
    # dist_ref:   (TM, 1)        VMEM
    # offset_ref: (1, num_rbf)   VMEM  (grid-resident via constant index_map)
    # out_ref:    (TM, num_rbf)  VMEM
    coeff = coeff_ref[0, 0]
    diff = dist_ref[...] - offset_ref[...]            # broadcast -> (TM, num_rbf)
    out_ref[...] = jnp.exp(coeff * (diff * diff)).astype(out_ref.dtype)


def _round_up(x, m):
    return ((x + m - 1) // m) * m


def gaussian_smearing(dist, offset, coeff, *, tm=8192, out_dtype=jnp.float32):
    """dist: (N,) f32; offset: (num_rbf,) f32; coeff: scalar f32.

    Returns (N, num_rbf) array of dtype `out_dtype` matching
    exp(coeff * (dist[:, None] - offset[None, :])**2).
    """
    n = dist.shape[0]
    num_rbf = offset.shape[0]

    # Layout plumbing only (reshapes are metadata-level in XLA; no HBM pass).
    dist_2d = dist.astype(jnp.float32).reshape(n, 1)
    offset_2d = offset.astype(jnp.float32).reshape(1, num_rbf)
    coeff_2d = jnp.asarray(coeff, jnp.float32).reshape(1, 1)

    # Row tile: big (default 8192) to amortize per-step overhead, clamped to
    # the problem size, multiple of 8 (sublane constraint), and capped so the
    # grid keeps >= 2 steps (both v7x TensorCores get work).
    n8 = _round_up(n, 8)
    tm_eff = max(8, min(tm, n8))
    if n8 >= 16:
        tm_eff = min(tm_eff, _round_up(pl.cdiv(n8, 2), 8))
    grid = (pl.cdiv(n, tm_eff),)

    # VMEM budget: double-buffered dist + output tiles (lane-padded to 128)
    # plus the resident offset row; 50% headroom, capped below v7x physical.
    lanes = 128
    rbf_pad = _round_up(num_rbf, lanes)
    out_itemsize = jnp.dtype(out_dtype).itemsize
    vmem_need = (2 * tm_eff * lanes * 4               # dist tiles (padded to 128 lanes)
                 + 2 * tm_eff * rbf_pad * out_itemsize  # output tiles
                 + 8 * rbf_pad * 4)                   # resident offset row
    vmem_limit = min(int(vmem_need * 1.5) + (1 << 20), 48 * 1024 * 1024)

    cost = pl.CostEstimate(
        flops=3 * n * num_rbf,                        # sub, mul, mul per element
        transcendentals=n * num_rbf,                  # one exp per element
        bytes_accessed=4 * n + 4 * num_rbf + 4 + n * num_rbf * out_itemsize,
    )

    return pl.pallas_call(
        _gaussian_smearing_kernel,
        out_shape=jax.ShapeDtypeStruct((n, num_rbf), out_dtype),
        grid_spec=pltpu.PrefetchScalarGridSpec(
            num_scalar_prefetch=0,
            grid=grid,
            in_specs=[
                pl.BlockSpec(memory_space=pltpu.MemorySpace.SMEM),   # coeff scalar
                pl.BlockSpec((tm_eff, 1), lambda i: (i, 0)),         # dist tile
                pl.BlockSpec((1, num_rbf), lambda i: (0, 0)),        # offset (resident)
            ],
            out_specs=pl.BlockSpec((tm_eff, num_rbf), lambda i: (i, 0)),
        ),
        compiler_params=pltpu.CompilerParams(
            dimension_semantics=("parallel",),
            vmem_limit_bytes=vmem_limit,
        ),
        cost_estimate=cost,
    )(coeff_2d, dist_2d, offset_2d)


def gaussian_smearing_ref(dist, offset, coeff):
    d = dist[:, None] - offset[None, :]
    return jnp.exp(coeff * d * d)


if __name__ == "__main__":
    cutoff_lower, cutoff_upper, num_rbf = 0.0, 5.0, 50

    # Deterministic "parameters" (same as the module's _initial_params).
    offset = jnp.linspace(cutoff_lower, cutoff_upper, num_rbf, dtype=jnp.float32)
    coeff = -0.5 / (offset[1] - offset[0]) ** 2

    # Example input: batch of 64 pairwise distances in [0, cutoff_upper].
    key = jax.random.PRNGKey(0)
    dist = jax.random.uniform(
        key, (64,), dtype=jnp.float32, minval=0.0, maxval=cutoff_upper)

    out = jax.block_until_ready(gaussian_smearing(dist, offset, coeff))
    ref = gaussian_smearing_ref(dist, offset, coeff)
    assert out.shape == (64, num_rbf)
    assert jnp.allclose(out, ref, atol=1e-5, rtol=1e-5)

    # Ragged N (not a multiple of the tile) to verify the cdiv / tail path.
    dist2 = jax.random.uniform(
        jax.random.PRNGKey(1), (61,), dtype=jnp.float32,
        minval=0.0, maxval=cutoff_upper)
    out2 = jax.block_until_ready(gaussian_smearing(dist2, offset, coeff))
    ref2 = gaussian_smearing_ref(dist2, offset, coeff)
    assert out2.shape == (61, num_rbf)
    assert jnp.allclose(out2, ref2, atol=1e-5, rtol=1e-5)

    # Optional reduced-precision output path (halves HBM write traffic).
    out_bf16 = jax.block_until_ready(
        gaussian_smearing(dist, offset, coeff, out_dtype=jnp.bfloat16))
    assert out_bf16.dtype == jnp.bfloat16
    assert jnp.allclose(out_bf16.astype(jnp.float32), ref, atol=2e-2, rtol=2e-2)

    print("KERNEL_OK")
</pallas_src>

<mosaic_0001>
module attributes {stable_mosaic.version = 11 : i64} {
  func.func @_gaussian_smearing_kernel(%arg0: i32, %arg1: memref<1x1xf32, #tpu.memory_space<smem>>, %arg2: memref<32x1xf32, #tpu.memory_space<vmem>>, %arg3: memref<1x50xf32, #tpu.memory_space<vmem>>, %arg4: memref<32x50xf32, #tpu.memory_space<vmem>>) attributes {dimension_semantics = [#tpu.dimension_semantics<parallel>], iteration_bounds = array<i64: 2>, scalar_prefetch = 0 : i64, scratch_operands = 0 : i64, tpu.core_type = #tpu.core_type<tc>, window_params = [{transform_indices = @transform_0, window_bounds = array<i64: 1, 1>}, {transform_indices = @transform_1, window_bounds = array<i64: 32, 1>}, {pipeline_mode = #tpu.pipeline_mode<synchronous>, transform_indices = @transform_2, window_bounds = array<i64: 1, 50>}, {transform_indices = @transform_3, window_bounds = array<i64: 32, 50>}]} {
    %c0 = arith.constant 0 : index
    %c0_0 = arith.constant 0 : index
    %0 = memref.load %arg1[%c0, %c0_0] : memref<1x1xf32, #tpu.memory_space<smem>>
    %c0_1 = arith.constant 0 : index
    %c0_2 = arith.constant 0 : index
    %1 = vector.load %arg2[%c0_1, %c0_2] : memref<32x1xf32, #tpu.memory_space<vmem>>, vector<32x1xf32>
    %c0_3 = arith.constant 0 : index
    %c0_4 = arith.constant 0 : index
    %2 = vector.load %arg3[%c0_3, %c0_4] : memref<1x50xf32, #tpu.memory_space<vmem>>, vector<1x50xf32>
    %3 = vector.broadcast %1 : vector<32x1xf32> to vector<32x50xf32>
    %4 = vector.broadcast %2 : vector<1x50xf32> to vector<32x50xf32>
    %5 = arith.subf %3, %4 : vector<32x50xf32>
    %6 = arith.mulf %5, %5 : vector<32x50xf32>
    %7 = vector.broadcast %0 : f32 to vector<32x50xf32>
    %8 = arith.mulf %7, %6 : vector<32x50xf32>
    %9 = math.exp %8 : vector<32x50xf32>
    %c0_5 = arith.constant 0 : index
    %c0_6 = arith.constant 0 : index
    %10 = vector.load %arg4[%c0_5, %c0_6] : memref<32x50xf32, #tpu.memory_space<vmem>>, vector<32x50xf32>
    tpu.vector_store %arg4[%c0_5, %c0_6], %9 {strides = array<i32>} : memref<32x50xf32, #tpu.memory_space<vmem>>, vector<32x50xf32>,
    return
  }
  func.func @transform_0(%arg0: i32) -> (i32, i32) {
    %c0_i32 = arith.constant 0 : i32
    %c0_i32_0 = arith.constant 0 : i32
    %c0_i32_1 = arith.constant 0 : i32
    return %c0_i32, %c0_i32_0 : i32, i32
  }
  func.func @transform_1(%arg0: i32) -> (i32, i32) {
    %c0_i32 = arith.constant 0 : i32
    %c0_i32_0 = arith.constant 0 : i32
    return %arg0, %c0_i32 : i32, i32
  }
  func.func @transform_2(%arg0: i32) -> (i32, i32) {
    %c0_i32 = arith.constant 0 : i32
    %c0_i32_0 = arith.constant 0 : i32
    %c0_i32_1 = arith.constant 0 : i32
    return %c0_i32, %c0_i32_0 : i32, i32
  }
  func.func @transform_3(%arg0: i32) -> (i32, i32) {
    %c0_i32 = arith.constant 0 : i32
    %c0_i32_0 = arith.constant 0 : i32
    return %arg0, %c0_i32 : i32, i32
  }
}

</mosaic_0001>

<llo_original>
// kernel: tpu_custom_call.1
$region0: #{tpu_custom_call.1}
  #allocation0 [shape = 'u32[]', space=smem, size = 0x4, offset = 0x4, fixed_abs, tag = 'smem constant byte address 0x4 - core index']
  #allocation1 [shape = 'u32[144,128]{1,0:T(1,128)}', space=vmem, size = 0x12000, scoped, tag = 'internal scratch']
  #allocation2 [shape = 'f32[1,1]{1,0:T(1,128)S(6)}', space=smem, size = 0x200, scoped, tag = 'scoped memory for tpu_custom_call.1']
  %s0 = inlined_call_operand.<no memory space> [shape: f32[1,1], index: 0, kind: input, shape index: {}]
  %s1 = inlined_call_operand.vmem [shape: f32[64,1], index: 1, kind: input, shape index: {}]
  %s2 = inlined_call_operand.vmem [shape: f32[1,50], index: 2, kind: input, shape index: {}]
  %s3 = inlined_call_operand.vmem [shape: f32[64,50], index: 3, kind: output, shape index: {}]
  %s4 = sld [smem:[#allocation0]]
  $region45: #{tpu_custom_call.1} parent=0
    _
  %s6 = ssub.s32 1, %s4
  %s7 = scalar_select 0, %s6, %s4
  %8 = sst [smem:[#allocation2]] %s0
  loop: start=0, step=1, limit=4
  $region2: #{tpu_custom_call.1} parent=0 // loop_pre_header
    _
  $region3: #{tpu_custom_call.1} parent=0 // loop_header
    %s10 = sphi 0, %s14
    %p11 = scmp.ge.s32.totalorder %s10, 4
    %s18 = sphi 0, %s18
    %s20 = sphi 0, %s18
    %s21 = sphi 0, %s20
    %s35 = sphi 0, %s21
    %s41 = sphi 0, %s43
    %s44 = sphi 0, %s41
    %s45 = sphi 0, %s44
    %s61 = sphi 0, %s45
    %s65 = sphi 0, %s65
    %s67 = sphi 0, %s65
    %s68 = sphi 0, %s67
    %s82 = sphi 0, %s68
    %s88 = sphi 0, %s90
    %s91 = sphi 0, %s88
    %s92 = sphi 0, %s91
    %s108 = sphi 0, %s92
  $region4: #{tpu_custom_call.1} parent=0 // loop_header_branch
    %13 = sbr.rel (%p11) target = $region8
  $region5: #{tpu_custom_call.1} parent=0 // loop_body
    %s15 = ssub.s32 %s10, 1
    %s16 = ssub.s32 %s10, 2
    %s17 = sadd.s32 %s10, 1
    %s19 = sadd.s32 %s18, 1
    %p22 = scmp.eq.s32.totalorder %s10, 1
    %p23 = scmp.ne.s32.totalorder %s18, %s20
    %p24 = scmp.eq.s32.totalorder %s10, 0
    %p25 = por %p23, %p24
    %p26 = scmp.ne.s32.totalorder %s18, %s20
    %p27 = scmp.eq.s32.totalorder %s15, 1
    %p28 = por %p26, %p27
    %p29 = scmp.ne.s32.totalorder %s20, %s21
    %p30 = scmp.eq.s32.totalorder %s15, 0
    %p31 = por %p29, %p30
    %p32 = scmp.ne.s32.totalorder %s20, %s21
    %p33 = scmp.eq.s32.totalorder %s16, 1
    %p34 = por %p32, %p33
    %p36 = scmp.ne.s32.totalorder %s21, %s35
    %p37 = scmp.eq.s32.totalorder %s16, 0
    %p38 = por %p36, %p37
    %s39 = ssub.s32 %s10, %s17
    %p40 = scmp.eq.s32.totalorder %s39, 0
    %s42 = sadd.s32 %s41, 1
    %s43 = scalar_select %p40, %s41, %s42
    %p46 = pneg %p40
    %p47 = scmp.eq.s32.totalorder %s10, 1
    %p48 = por %p46, %p47
    %p49 = scmp.ne.s32.totalorder %s41, %s44
    %p50 = scmp.eq.s32.totalorder %s10, 0
    %p51 = por %p49, %p50
    %p52 = scmp.ne.s32.totalorder %s41, %s44
    %p53 = scmp.eq.s32.totalorder %s15, 1
    %p54 = por %p52, %p53
    %p55 = scmp.ne.s32.totalorder %s44, %s45
    %p56 = scmp.eq.s32.totalorder %s15, 0
    %p57 = por %p55, %p56
    %p58 = scmp.ne.s32.totalorder %s44, %s45
    %p59 = scmp.eq.s32.totalorder %s16, 1
    %p60 = por %p58, %p59
    %p62 = scmp.ne.s32.totalorder %s45, %s61
    %p63 = scmp.eq.s32.totalorder %s16, 0
    %p64 = por %p62, %p63
    %s66 = sadd.s32 %s65, 1
    %p69 = scmp.eq.s32.totalorder %s10, 1
    %p70 = scmp.ne.s32.totalorder %s65, %s67
    %p71 = scmp.eq.s32.totalorder %s10, 0
    %p72 = por %p70, %p71
    %p73 = scmp.ne.s32.totalorder %s65, %s67
    %p74 = scmp.eq.s32.totalorder %s15, 1
    %p75 = por %p73, %p74
    %p76 = scmp.ne.s32.totalorder %s67, %s68
    %p77 = scmp.eq.s32.totalorder %s15, 0
    %p78 = por %p76, %p77
    %p79 = scmp.ne.s32.totalorder %s67, %s68
    %p80 = scmp.eq.s32.totalorder %s16, 1
    %p81 = por %p79, %p80
    %p83 = scmp.ne.s32.totalorder %s68, %s82
    %p84 = scmp.eq.s32.totalorder %s16, 0
    %p85 = por %p83, %p84
    %s86 = ssub.s32 %s10, %s17
    %p87 = scmp.eq.s32.totalorder %s86, 0
    %s89 = sadd.s32 %s88, 1
    %s90 = scalar_select %p87, %s88, %s89
    %p93 = pneg %p87
    %p94 = scmp.eq.s32.totalorder %s10, 1
    %p95 = por %p93, %p94
    %p96 = scmp.ne.s32.totalorder %s88, %s91
    %p97 = scmp.eq.s32.totalorder %s10, 0
    %p98 = por %p96, %p97
    %p99 = scmp.ne.s32.totalorder %s88, %s91
    %p100 = scmp.eq.s32.totalorder %s15, 1
    %p101 = por %p99, %p100
    %p102 = scmp.ne.s32.totalorder %s91, %s92
    %p103 = scmp.eq.s32.totalorder %s15, 0
    %p104 = por %p102, %p103
    %p105 = scmp.ne.s32.totalorder %s91, %s92
    %p106 = scmp.eq.s32.totalorder %s16, 1
    %p107 = por %p105, %p106
    %p109 = scmp.ne.s32.totalorder %s92, %s108
    %p110 = scmp.eq.s32.totalorder %s16, 0
    %p111 = por %p109, %p110
    %p112 = scmp.le.s32.totalorder 1, %s10
    %p113 = scmp.lt.s32.totalorder %s10, 3
    %p114 = pnand %p112, %p113
    %p115 = pneg %p114
    // Predicated region
    $region9: #{tpu_custom_call.1} parent=5 // pred_check
      _
    $region10: #{tpu_custom_call.1} parent=5 // pred_check_branch
      %117 = sbr.rel (%p114) target = $region12
    $region11: #{tpu_custom_call.1} parent=5 // pred_region
      %s118 = ssub.s32 %s10, 1
      // Predicated region
      $region13: #{tpu_custom_call.1} parent=11 // pred_check
        %p119 = pneg %p31
      $region14: #{tpu_custom_call.1} parent=11 // pred_check_branch
        %121 = sbr.rel (%p119) target = $region16
      $region15: #{tpu_custom_call.1} parent=11 // pred_region
        _
      $region16: #{tpu_custom_call.1} parent=11 // pred_fallthru
        _
      // Predicated region
      $region17: #{tpu_custom_call.1} parent=11 // pred_check
        %p122 = pneg %p78
      $region18: #{tpu_custom_call.1} parent=11 // pred_check_branch
        %124 = sbr.rel (%p122) target = $region20
      $region19: #{tpu_custom_call.1} parent=11 // pred_region
        _
      $region20: #{tpu_custom_call.1} parent=11 // pred_fallthru
        _
    $region12: #{tpu_custom_call.1} parent=5 // pred_fallthru
      _
    %p125 = scmp.lt.s32.totalorder %s10, 2
    // Predicated region
    $region21: #{tpu_custom_call.1} parent=5 // pred_check
      %p126 = pneg %p125
    $region22: #{tpu_custom_call.1} parent=5 // pred_check_branch
      %128 = sbr.rel (%p126) target = $region24
    $region23: #{tpu_custom_call.1} parent=5 // pred_region
      // Predicated region
      $region25: #{tpu_custom_call.1} parent=23 // pred_check
        %p129 = pneg %p51
      $region26: #{tpu_custom_call.1} parent=23 // pred_check_branch
        %131 = sbr.rel (%p129) target = $region28
      $region27: #{tpu_custom_call.1} parent=23 // pred_region
        %s132 = smul.u32 4, %s10
        %p133 = scmp.lt.s32.totalorder %s132, 7
        %s134 = scalar_select %p133, %s132, 7
        %s135 = smul.addr %s134, 8
        %s136 = scalar_lea.vmem %s1, %s135
        %s137 = smul.u32 4, %s10
      $region28: #{tpu_custom_call.1} parent=23 // pred_fallthru
        _
    $region24: #{tpu_custom_call.1} parent=5 // pred_fallthru
      _
    %p138 = scmp.le.s32.totalorder 1, %s10
    %p139 = scmp.lt.s32.totalorder %s10, 3
    %p140 = pnand %p138, %p139
    %p141 = pneg %p140
    // Predicated region
    $region29: #{tpu_custom_call.1} parent=5 // pred_check
      _
    $region30: #{tpu_custom_call.1} parent=5 // pred_check_branch
      %143 = sbr.rel (%p140) target = $region32
    $region31: #{tpu_custom_call.1} parent=5 // pred_region
      %s144 = ssub.s32 %s10, 1
      %p145 = pneg %p31
      %p146 = pneg %p28
      %s147 = smul.u32 4, %s15
      %p148 = scmp.lt.s32.totalorder %s147, 7
      %s149 = scalar_select %p148, %s147, 7
      %s150 = smul.addr %s149, 8
      %s151 = scalar_lea.vmem %s1, %s150
      %p152 = pneg %p57
      %p153 = pneg %p54
      %p154 = pneg %p78
      %p155 = pneg %p75
      %p156 = pneg %p104
      %p157 = pneg %p101
      %s158 = smul.u32 4, %s15
      %p159 = scmp.lt.s32.totalorder %s158, 7
      %s160 = scalar_select %p159, %s158, 7
      %s161 = smul.addr %s160, 8
      %s162 = scalar_lea.vmem %s3, %s161
      %s163 = smul.u32 4, %s15
      %p164 = scmp.lt.s32.totalorder %s163, 7
      %s165 = scalar_select %p164, %s163, 7
      %s166 = smul.addr %s165, 8
      %s167 = scalar_lea.vmem %s1, %s166
      %s168 = smul.u32 4, %s15
      %s169 = smul.u32 4, %s15
      %p170 = scmp.lt.s32.totalorder %s169, 7
      %s171 = scalar_select %p170, %s169, 7
      %s172 = smul.addr %s171, 8
      %s173 = scalar_lea.vmem %s3, %s172
      %s174 = smul.u32 4, %s15
      %s175 = sld [smem:[#allocation2]]
      %v176 = vld [vmem:[%s167] sm:$0xff]
      %v177 = vld [vmem:[%s167 + $0x8] sm:$0xff]
      %v178 = vld [vmem:[%s167 + $0x10] sm:$0xff]
      %v179 = vld [vmem:[%s167 + $0x18] sm:$0xff]
      %v180 = vld [vmem:[%s2] sm:$0x1]
      %182 = vset.pattern.permute.xlu0 0
      %183 = vperm.xlu0 %182, %v176
      %v184 = vpop.permute.xlu0 %183
      %187 = vset.pattern.permute.xlu0 0
      %188 = vperm.xlu0 %187, %v177
      %v189 = vpop.permute.xlu0 %188
      %192 = vset.pattern.permute.xlu0 0
      %193 = vperm.xlu0 %192, %v178
      %v194 = vpop.permute.xlu0 %193
      %197 = vset.pattern.permute.xlu0 0
      %198 = vperm.xlu0 %197, %v179
      %v199 = vpop.permute.xlu0 %198
      %v202 = vlaneseq
      %v203 = vshrl.u32 %v202, 7
      %v204 = vsub.s32 0, %v203
      %v205 = vrot.slane %v180, %v204
      %v207 = vsub.f32 %v184, %v205
      %v208 = vsub.f32 %v189, %v205
      %v209 = vsub.f32 %v194, %v205
      %v210 = vsub.f32 %v199, %v205
      %v211 = vmul.f32 %v207, %v207
      %v212 = vmul.f32 %v208, %v208
      %v213 = vmul.f32 %v209, %v209
      %v214 = vmul.f32 %v210, %v210
      %v215 = vstv %s175
      %v216 = vmul.f32 %v215, %v211
      %v217 = vmul.f32 %v215, %v212
      %v218 = vmul.f32 %v215, %v213
      %v219 = vmul.f32 %v215, %v214
      %v220 = vmul.f32 %v216, 1.442695
      %v221 = vpow.pop %v220
      %v222 = vmul.f32 %v217, 1.442695
      %v223 = vpow.pop %v222
      %v224 = vmul.f32 %v218, 1.442695
      %v225 = vpow.pop %v224
      %v226 = vmul.f32 %v219, 1.442695
      %v227 = vpow.pop %v226
      %vm228 = vcmask 408576
      %229 = vst.msk [vmem:[%s173] sm:$0xff] %vm228, %v221
      %230 = vst.msk [vmem:[%s173 + $0x8] sm:$0xff] %vm228, %v223
      %231 = vst.msk [vmem:[%s173 + $0x10] sm:$0xff] %vm228, %v225
      %232 = vst.msk [vmem:[%s173 + $0x18] sm:$0xff] %vm228, %v227
      %s233 = smul.u32 4, %s15
      %p234 = scmp.lt.s32.totalorder %s233, 7
      %s235 = scalar_select %p234, %s233, 7
      %s236 = smul.addr %s235, 8
      %s237 = scalar_lea.vmem %s3, %s236
      // Predicated region
      $region33: #{tpu_custom_call.1} parent=31 // pred_check
        %p238 = pneg %p101
      $region34: #{tpu_custom_call.1} parent=31 // pred_check_branch
        %240 = sbr.rel (%p238) target = $region36
      $region35: #{tpu_custom_call.1} parent=31 // pred_region
        %s241 = smul.u32 4, %s15
      $region36: #{tpu_custom_call.1} parent=31 // pred_fallthru
        _
    $region32: #{tpu_custom_call.1} parent=5 // pred_fallthru
      _
    %p242 = scmp.le.s32.totalorder 2, %s10
    // Predicated region
    $region37: #{tpu_custom_call.1} parent=5 // pred_check
      %p243 = pneg %p242
    $region38: #{tpu_custom_call.1} parent=5 // pred_check_branch
      %245 = sbr.rel (%p243) target = $region40
    $region39: #{tpu_custom_call.1} parent=5 // pred_region
      %s246 = ssub.s32 %s10, 2
      // Predicated region
      $region41: #{tpu_custom_call.1} parent=39 // pred_check
        %p247 = pneg %p107
      $region42: #{tpu_custom_call.1} parent=39 // pred_check_branch
        %249 = sbr.rel (%p247) target = $region44
      $region43: #{tpu_custom_call.1} parent=39 // pred_region
        %s250 = smul.u32 4, %s16
        %p251 = scmp.lt.s32.totalorder %s250, 7
        %s252 = scalar_select %p251, %s250, 7
        %s253 = smul.addr %s252, 8
        %s254 = scalar_lea.vmem %s3, %s253
      $region44: #{tpu_custom_call.1} parent=39 // pred_fallthru
        _
    $region40: #{tpu_custom_call.1} parent=5 // pred_fallthru
      _
  $region6: #{tpu_custom_call.1} parent=0 // loop_footer
    %s14 = sadd.s32 1, %s10
  $region7: #{tpu_custom_call.1} parent=0 // loop_footer_branch
    %9 = sbr.rel target = $region3
  $region8: #{tpu_custom_call.1} parent=0 // loop_exit
    _

</llo_original>
